<compile_context>
chip_gen: v7x
topology: tpu7x:2x2x1
jax: 0.10.0
libtpu: 0.0.40
codegen_flags: <defaults>
</compile_context>

<pallas_src>
import jax
import jax.numpy as jnp
from jax import lax
from jax.experimental import pallas as pl
from jax.experimental.pallas import tpu as pltpu
from jax.scipy.special import erf as _jsp_erf


_INV_SQRT2 = 0.7071067811865476


def _gelu_exact(x):
    """Exact (erf-based) GELU, matching PyTorch nn.GELU() (approximate='none').

    erf is evaluated with the Abramowitz & Stegun 7.1.26 polynomial
    (|abs err| < 1.5e-7 for the exact-divide form; the approx reciprocal adds
    < ~1e-3 absolute, below bf16-matmul noise) so it lowers to plain VPU/EUP
    ops (exp/recip/mul/add/select) without relying on an erf primitive in the
    Mosaic lowering.
    """
    z = x * _INV_SQRT2
    a = jnp.abs(z)
    # approx=True -> pure EUP vrcp (separate bundle slot), no Newton VALU ops.
    t = pl.reciprocal(1.0 + 0.3275911 * a, approx=True)
    poly = t * (0.254829592 + t * (-0.284496736 + t * (1.421413741
               + t * (-1.453152027 + t * 1.061405429))))
    erf_abs = 1.0 - poly * jnp.exp(-(a * a))
    erf = jnp.where(z >= 0.0, erf_abs, -erf_abs)
    return 0.5 * x * (1.0 + erf)


def triplet_embed_kernel(x_ref, m_ref, w_ref, b_ref, out_ref, acc_ref, cnt_ref):
    """Grid = (batch, seq-tiles); one sequence per batch step.

    x_ref   : (TS, Hp) bf16  token embeddings for this (batch, seq-tile)
    m_ref   : (TS, 1)  f32   attention mask aligned to the row tile
    w_ref   : (Hp, Hp) bf16  dense weight of the synthetic base model
    b_ref   : (1, Hp)  f32   dense bias
    out_ref : (1, Hp)  f32   L2-normalized mean-pooled embedding (this batch)
    acc_ref : (1, Hp)  f32   VMEM scratch: masked running sum over seq tiles
    cnt_ref : (1, 1)   f32   VMEM scratch: running (unmasked-token) count
    """
    si = pl.program_id(1)

    @pl.when(si == 0)
    def _init():
        acc_ref[...] = jnp.zeros_like(acc_ref)
        cnt_ref[...] = jnp.zeros_like(cnt_ref)

    # ---- synthetic base model: dense (bf16 in, f32 acc on MXU) + exact GELU
    h = jnp.dot(x_ref[...], w_ref[...], preferred_element_type=jnp.float32)
    h = _gelu_exact(h + b_ref[...])                           # (TS, Hp) f32

    # ---- masked partial sums for mean pooling (== _mean_pooled numerator)
    m = m_ref[...]                                            # (TS, 1) f32
    acc_ref[...] += jnp.sum(h * m, axis=0, keepdims=True)     # (1, Hp)
    cnt_ref[...] += jnp.sum(m, axis=0, keepdims=True)         # (1, 1)

    # ---- finalize: mean pooling + F.normalize(p=2, dim=1)
    @pl.when(si == pl.num_programs(1) - 1)
    def _finalize():
        counts = jnp.maximum(cnt_ref[...], 1.0)               # guard empty rows
        # approx reciprocal is a uniform per-row scale -> cancels in normalize
        pooled = acc_ref[...] * pl.reciprocal(counts, approx=True)
        sq = jnp.sum(pooled * pooled, axis=1, keepdims=True)
        inv_norm = lax.rsqrt(jnp.maximum(sq, 1e-24))          # eps^2 = (1e-12)^2
        out_ref[...] = (pooled * inv_norm).astype(out_ref.dtype)


def _round_up(x, m):
    return (x + m - 1) // m * m


def _pick_seq_tile(S, max_tile=512):
    """Largest divisor of S that is a multiple of 8 and <= max_tile.

    Falls back to the whole sequence (always legal: block dim == array dim),
    which only matters for pathological S (e.g. a prime > 512).
    """
    if S <= max_tile:
        return S
    for t in range(max_tile, 7, -1):
        if S % t == 0 and t % 8 == 0:
            return t
    return S


@jax.jit
def triplet_embedding_forward(input_ids, attention_mask, embed_table, w, b):
    """Mirrors TripletEmbeddingModel.forward.

    base_model := embedding lookup -> dense(H,H) -> exact GELU   (synthetic)
    module     := masked mean pooling -> L2 normalize (p=2, dim=1)
    """
    V, H = embed_table.shape
    B, S = input_ids.shape
    Hp = _round_up(max(H, 128), 128)             # lane-dense hidden dim

    # Zero-pad params to Hp.  Exact: padded x features are 0, padded W
    # rows/cols and bias are 0, GELU(0) = 0, so padded lanes stay 0 throughout.
    emb_bf = jnp.pad(embed_table.astype(jnp.bfloat16), ((0, 0), (0, Hp - H)))
    w_bf = jnp.pad(w, ((0, Hp - H), (0, Hp - H))).astype(jnp.bfloat16)
    b_p = jnp.pad(b.reshape(1, H), ((0, 0), (0, Hp - H)))

    # Glue: embedding gather, emitted directly in bf16 (halves HBM traffic).
    # TODO(synk): fuse the gather into the kernel (scalar-prefetch input_ids +
    # manual DMA gather from an HBM-resident table) to drop this round-trip.
    x = jnp.take(emb_bf, input_ids, axis=0)                        # (B,S,Hp) bf16
    mask3 = attention_mask.astype(jnp.float32)[..., None]          # (B,S,1) f32

    # Tiling: one sequence per "parallel" batch step; seq tiled + accumulated.
    TS = _pick_seq_tile(S)
    grid = (B, S // TS)

    # Scoped-VMEM cap: double-buffered tiles + margin, clamped for v5e..v7x.
    tile_bytes = TS * Hp * 2 + TS * 128 * 4 + Hp * Hp * 2 + 2 * Hp * 4
    vmem_limit = int(min(max(4 * tile_bytes, 8 << 20), 48 << 20))

    out = pl.pallas_call(
        triplet_embed_kernel,
        out_shape=jax.ShapeDtypeStruct((B, 1, Hp), jnp.float32),
        grid_spec=pltpu.PrefetchScalarGridSpec(
            num_scalar_prefetch=0,
            grid=grid,
            in_specs=[
                pl.BlockSpec((None, TS, Hp), lambda bi, si: (bi, si, 0)),  # x
                pl.BlockSpec((None, TS, 1), lambda bi, si: (bi, si, 0)),   # mask
                pl.BlockSpec((Hp, Hp), lambda bi, si: (0, 0)),             # W
                pl.BlockSpec((1, Hp), lambda bi, si: (0, 0)),              # bias
            ],
            out_specs=pl.BlockSpec((None, 1, Hp), lambda bi, si: (bi, 0, 0)),
            scratch_shapes=[
                pltpu.VMEM((1, Hp), jnp.float32),   # masked running sum
                pltpu.VMEM((1, 1), jnp.float32),    # running token count
            ],
        ),
        compiler_params=pltpu.CompilerParams(
            dimension_semantics=("parallel", "arbitrary"),
            vmem_limit_bytes=vmem_limit,
        ),
    )(x, mask3, w_bf, b_p)

    return out[:, 0, :H]                          # strip lane padding


if __name__ == "__main__":
    # Small, module-consistent shapes.
    B, S, H, V = 2, 8, 32, 64

    key = jax.random.PRNGKey(0)
    k_emb, k_w, k_b, k_ids = jax.random.split(key, 4)

    embed_table = jax.random.normal(k_emb, (V, H), dtype=jnp.float32) * 0.02
    w = jax.random.normal(k_w, (H, H), dtype=jnp.float32) * 0.05
    b = jax.random.normal(k_b, (1, H), dtype=jnp.float32) * 0.01

    input_ids = jax.random.randint(k_ids, (B, S), 0, V, dtype=jnp.int32)
    attention_mask = jnp.array(
        [[1, 1, 1, 1, 1, 1, 0, 0],
         [1, 1, 1, 1, 0, 0, 0, 0]], dtype=jnp.int32)

    out = triplet_embedding_forward(input_ids, attention_mask, embed_table, w, b)
    out = jax.block_until_ready(out)

    # Sanity 1: shape and unit L2 norm per row.
    norms = jnp.sqrt(jnp.sum(out * out, axis=1))
    assert out.shape == (B, H)
    assert bool(jnp.all(jnp.abs(norms - 1.0) < 1e-4))

    # Sanity 2: loose agreement with a pure-f32 JAX reference (kernel uses
    # bf16 matmul inputs + approx-recip erf, so allow a small tolerance).
    xf = jnp.take(embed_table, input_ids, axis=0)                 # (B,S,H) f32
    hf = jnp.einsum("bsh,hk->bsk", xf, w) + b
    hf = 0.5 * hf * (1.0 + _jsp_erf(hf * _INV_SQRT2))             # exact GELU
    mf = attention_mask.astype(jnp.float32)
    pooled = (hf * mf[..., None]).sum(axis=1) / jnp.maximum(
        mf.sum(axis=1, keepdims=True), 1.0)
    ref = pooled / jnp.maximum(
        jnp.sqrt(jnp.sum(pooled * pooled, axis=1, keepdims=True)), 1e-12)
    max_err = float(jnp.max(jnp.abs(out - ref)))
    assert max_err < 5e-2, f"max abs err vs f32 reference: {max_err}"

    print("KERNEL_OK")
</pallas_src>

<mosaic_0001>
module attributes {stable_mosaic.version = 11 : i64} {
  func.func @triplet_embed_kernel(%arg0: i32, %arg1: i32, %arg2: memref<1x8x128xbf16, #tpu.memory_space<vmem>>, %arg3: memref<1x8x1xf32, #tpu.memory_space<vmem>>, %arg4: memref<128x128xbf16, #tpu.memory_space<vmem>>, %arg5: memref<1x128xf32, #tpu.memory_space<vmem>>, %arg6: memref<1x1x128xf32, #tpu.memory_space<vmem>>, %arg7: memref<1x128xf32, #tpu.memory_space<vmem>>, %arg8: memref<1x1xf32, #tpu.memory_space<vmem>>) attributes {dimension_semantics = [#tpu.dimension_semantics<parallel>, #tpu.dimension_semantics<arbitrary>], iteration_bounds = array<i64: 2, 1>, scalar_prefetch = 0 : i64, scratch_operands = 2 : i64, tpu.core_type = #tpu.core_type<tc>, window_params = [{transform_indices = @transform_0, window_bounds = array<i64: 1, 8, 128>}, {transform_indices = @transform_1, window_bounds = array<i64: 1, 8, 1>}, {pipeline_mode = #tpu.pipeline_mode<synchronous>, transform_indices = @transform_2, window_bounds = array<i64: 128, 128>}, {pipeline_mode = #tpu.pipeline_mode<synchronous>, transform_indices = @transform_3, window_bounds = array<i64: 1, 128>}, {transform_indices = @transform_4, window_bounds = array<i64: 1, 1, 128>}]} {
    %c0_i32 = arith.constant 0 : i32
    %0 = arith.cmpi eq, %arg1, %c0_i32 : i32
    %1 = arith.extui %0 : i1 to i32
    %c0_i32_0 = arith.constant 0 : i32
    %2 = arith.cmpi ne, %1, %c0_i32_0 : i32
    scf.if %2 {
      %cst_36 = arith.constant 0.000000e+00 : f32
      %66 = vector.broadcast %cst_36 : f32 to vector<1x128xf32>
      %c0_37 = arith.constant 0 : index
      %c0_38 = arith.constant 0 : index
      %67 = vector.load %arg7[%c0_37, %c0_38] : memref<1x128xf32, #tpu.memory_space<vmem>>, vector<1x128xf32>
      tpu.vector_store %arg7[%c0_37, %c0_38], %66 {strides = array<i32>} : memref<1x128xf32, #tpu.memory_space<vmem>>, vector<1x128xf32>,
      %cst_39 = arith.constant 0.000000e+00 : f32
      %68 = vector.broadcast %cst_39 : f32 to vector<1x1xf32>
      %c0_40 = arith.constant 0 : index
      %c0_41 = arith.constant 0 : index
      %69 = vector.load %arg8[%c0_40, %c0_41] : memref<1x1xf32, #tpu.memory_space<vmem>>, vector<1x1xf32>
      tpu.vector_store %arg8[%c0_40, %c0_41], %68 {strides = array<i32>} : memref<1x1xf32, #tpu.memory_space<vmem>>, vector<1x1xf32>,
    } else {
    }
    %c0 = arith.constant 0 : index
    %c0_1 = arith.constant 0 : index
    %c0_2 = arith.constant 0 : index
    %3 = vector.load %arg2[%c0, %c0_1, %c0_2] : memref<1x8x128xbf16, #tpu.memory_space<vmem>>, vector<1x8x128xbf16>
    %4 = vector.shape_cast %3 : vector<1x8x128xbf16> to vector<8x128xbf16>
    %c0_3 = arith.constant 0 : index
    %c0_4 = arith.constant 0 : index
    %5 = vector.load %arg4[%c0_3, %c0_4] : memref<128x128xbf16, #tpu.memory_space<vmem>>, vector<128x128xbf16>
    %cst = arith.constant dense<0.000000e+00> : vector<8x128xf32>
    %6 = tpu.matmul %4, %5, %cst {dimension_numbers = #tpu.dot_dimension_numbers<[1], [0], [0], [1], [0, 0, 1, 1], [], []>} : vector<8x128xbf16>, vector<128x128xbf16>, vector<8x128xf32> -> vector<8x128xf32>
    %c0_5 = arith.constant 0 : index
    %c0_6 = arith.constant 0 : index
    %7 = vector.load %arg5[%c0_5, %c0_6] : memref<1x128xf32, #tpu.memory_space<vmem>>, vector<1x128xf32>
    %8 = vector.broadcast %7 : vector<1x128xf32> to vector<8x128xf32>
    %9 = arith.addf %6, %8 : vector<8x128xf32>
    %cst_7 = arith.constant 0.707106769 : f32
    %10 = vector.broadcast %cst_7 : f32 to vector<8x128xf32>
    %11 = arith.mulf %9, %10 : vector<8x128xf32>
    %12 = math.absf %11 : vector<8x128xf32>
    %cst_8 = arith.constant 0.327591091 : f32
    %13 = vector.broadcast %cst_8 : f32 to vector<8x128xf32>
    %14 = arith.mulf %13, %12 : vector<8x128xf32>
    %cst_9 = arith.constant 1.000000e+00 : f32
    %15 = vector.broadcast %cst_9 : f32 to vector<8x128xf32>
    %16 = arith.addf %15, %14 : vector<8x128xf32>
    %17 = tpu.reciprocal %16 {approx = true} : vector<8x128xf32> -> vector<8x128xf32>
    %cst_10 = arith.constant 1.06140542 : f32
    %18 = vector.broadcast %cst_10 : f32 to vector<8x128xf32>
    %19 = arith.mulf %17, %18 : vector<8x128xf32>
    %cst_11 = arith.constant -1.45315206 : f32
    %20 = vector.broadcast %cst_11 : f32 to vector<8x128xf32>
    %21 = arith.addf %20, %19 : vector<8x128xf32>
    %22 = arith.mulf %17, %21 : vector<8x128xf32>
    %cst_12 = arith.constant 1.42141378 : f32
    %23 = vector.broadcast %cst_12 : f32 to vector<8x128xf32>
    %24 = arith.addf %23, %22 : vector<8x128xf32>
    %25 = arith.mulf %17, %24 : vector<8x128xf32>
    %cst_13 = arith.constant -0.284496725 : f32
    %26 = vector.broadcast %cst_13 : f32 to vector<8x128xf32>
    %27 = arith.addf %26, %25 : vector<8x128xf32>
    %28 = arith.mulf %17, %27 : vector<8x128xf32>
    %cst_14 = arith.constant 0.254829586 : f32
    %29 = vector.broadcast %cst_14 : f32 to vector<8x128xf32>
    %30 = arith.addf %29, %28 : vector<8x128xf32>
    %31 = arith.mulf %17, %30 : vector<8x128xf32>
    %32 = arith.mulf %12, %12 : vector<8x128xf32>
    %cst_15 = arith.constant 0.000000e+00 : f32
    %33 = vector.broadcast %cst_15 : f32 to vector<8x128xf32>
    %34 = arith.subf %33, %32 : vector<8x128xf32>
    %35 = math.exp %34 : vector<8x128xf32>
    %36 = arith.mulf %31, %35 : vector<8x128xf32>
    %cst_16 = arith.constant 1.000000e+00 : f32
    %37 = vector.broadcast %cst_16 : f32 to vector<8x128xf32>
    %38 = arith.subf %37, %36 : vector<8x128xf32>
    %cst_17 = arith.constant 0.000000e+00 : f32
    %39 = vector.broadcast %cst_17 : f32 to vector<8x128xf32>
    %40 = arith.cmpf oge, %11, %39 : vector<8x128xf32>
    %cst_18 = arith.constant 0.000000e+00 : f32
    %41 = vector.broadcast %cst_18 : f32 to vector<8x128xf32>
    %42 = arith.subf %41, %38 : vector<8x128xf32>
    %43 = arith.select %40, %38, %42 : vector<8x128xi1>, vector<8x128xf32>
    %cst_19 = arith.constant 5.000000e-01 : f32
    %44 = vector.broadcast %cst_19 : f32 to vector<8x128xf32>
    %45 = arith.mulf %44, %9 : vector<8x128xf32>
    %cst_20 = arith.constant 1.000000e+00 : f32
    %46 = vector.broadcast %cst_20 : f32 to vector<8x128xf32>
    %47 = arith.addf %46, %43 : vector<8x128xf32>
    %48 = arith.mulf %45, %47 : vector<8x128xf32>
    %c0_21 = arith.constant 0 : index
    %c0_22 = arith.constant 0 : index
    %c0_23 = arith.constant 0 : index
    %49 = vector.load %arg3[%c0_21, %c0_22, %c0_23] : memref<1x8x1xf32, #tpu.memory_space<vmem>>, vector<1x8x1xf32>
    %50 = vector.shape_cast %49 : vector<1x8x1xf32> to vector<8x1xf32>
    %c0_24 = arith.constant 0 : index
    %c0_25 = arith.constant 0 : index
    %51 = vector.load %arg7[%c0_24, %c0_25] : memref<1x128xf32, #tpu.memory_space<vmem>>, vector<1x128xf32>
    %52 = vector.broadcast %50 : vector<8x1xf32> to vector<8x128xf32>
    %53 = arith.mulf %48, %52 : vector<8x128xf32>
    %cst_26 = arith.constant dense<0.000000e+00> : vector<128xf32>
    %54 = vector.multi_reduction <add>, %53, %cst_26 [0] : vector<8x128xf32> to vector<128xf32>
    %55 = vector.shape_cast %54 : vector<128xf32> to vector<1x128xf32>
    %56 = arith.addf %51, %55 : vector<1x128xf32>
    %c0_27 = arith.constant 0 : index
    %c0_28 = arith.constant 0 : index
    %57 = vector.load %arg7[%c0_27, %c0_28] : memref<1x128xf32, #tpu.memory_space<vmem>>, vector<1x128xf32>
    tpu.vector_store %arg7[%c0_27, %c0_28], %56 {strides = array<i32>} : memref<1x128xf32, #tpu.memory_space<vmem>>, vector<1x128xf32>,
    %c0_29 = arith.constant 0 : index
    %c0_30 = arith.constant 0 : index
    %58 = vector.load %arg8[%c0_29, %c0_30] : memref<1x1xf32, #tpu.memory_space<vmem>>, vector<1x1xf32>
    %cst_31 = arith.constant dense<0.000000e+00> : vector<1xf32>
    %59 = vector.multi_reduction <add>, %50, %cst_31 [0] : vector<8x1xf32> to vector<1xf32>
    %60 = vector.shape_cast %59 : vector<1xf32> to vector<1x1xf32>
    %61 = arith.addf %58, %60 : vector<1x1xf32>
    %c0_32 = arith.constant 0 : index
    %c0_33 = arith.constant 0 : index
    %62 = vector.load %arg8[%c0_32, %c0_33] : memref<1x1xf32, #tpu.memory_space<vmem>>, vector<1x1xf32>
    tpu.vector_store %arg8[%c0_32, %c0_33], %61 {strides = array<i32>} : memref<1x1xf32, #tpu.memory_space<vmem>>, vector<1x1xf32>,
    %c0_i32_34 = arith.constant 0 : i32
    %63 = arith.cmpi eq, %arg1, %c0_i32_34 : i32
    %64 = arith.extui %63 : i1 to i32
    %c0_i32_35 = arith.constant 0 : i32
    %65 = arith.cmpi ne, %64, %c0_i32_35 : i32
    scf.if %65 {
      %c0_36 = arith.constant 0 : index
      %c0_37 = arith.constant 0 : index
      %66 = vector.load %arg8[%c0_36, %c0_37] : memref<1x1xf32, #tpu.memory_space<vmem>>, vector<1x1xf32>
      %cst_38 = arith.constant 1.000000e+00 : f32
      %67 = vector.broadcast %cst_38 : f32 to vector<1x1xf32>
      %68 = arith.maximumf %66, %67 : vector<1x1xf32>
      %c0_39 = arith.constant 0 : index
      %c0_40 = arith.constant 0 : index
      %69 = vector.load %arg7[%c0_39, %c0_40] : memref<1x128xf32, #tpu.memory_space<vmem>>, vector<1x128xf32>
      %70 = tpu.reciprocal %68 {approx = true} : vector<1x1xf32> -> vector<1x1xf32>
      %71 = vector.broadcast %70 : vector<1x1xf32> to vector<1x128xf32>
      %72 = arith.mulf %69, %71 : vector<1x128xf32>
      %73 = arith.mulf %72, %72 : vector<1x128xf32>
      %cst_41 = arith.constant dense<0.000000e+00> : vector<1xf32>
      %74 = vector.multi_reduction <add>, %73, %cst_41 [1] : vector<1x128xf32> to vector<1xf32>
      %75 = vector.shape_cast %74 : vector<1xf32> to vector<1x1xf32>
      %cst_42 = arith.constant 1.000000e-24 : f32
      %76 = vector.broadcast %cst_42 : f32 to vector<1x1xf32>
      %77 = arith.maximumf %75, %76 : vector<1x1xf32>
      %78 = math.rsqrt %77 : vector<1x1xf32>
      %79 = vector.broadcast %78 : vector<1x1xf32> to vector<1x128xf32>
      %80 = arith.mulf %72, %79 : vector<1x128xf32>
      %c0_43 = arith.constant 0 : index
      %c0_44 = arith.constant 0 : index
      %c0_45 = arith.constant 0 : index
      %81 = vector.load %arg6[%c0_43, %c0_44, %c0_45] : memref<1x1x128xf32, #tpu.memory_space<vmem>>, vector<1x1x128xf32>
      %82 = vector.shape_cast %81 : vector<1x1x128xf32> to vector<1x128xf32>
      %83 = vector.shape_cast %80 : vector<1x128xf32> to vector<1x1x128xf32>
      tpu.vector_store %arg6[%c0_43, %c0_44, %c0_45], %83 {strides = array<i32>} : memref<1x1x128xf32, #tpu.memory_space<vmem>>, vector<1x1x128xf32>,
    } else {
    }
    return
  }
  func.func @transform_0(%arg0: i32, %arg1: i32) -> (i32, i32, i32) {
    %c0_i32 = arith.constant 0 : i32
    %c0_i32_0 = arith.constant 0 : i32
    return %arg0, %arg1, %c0_i32 : i32, i32, i32
  }
  func.func @transform_1(%arg0: i32, %arg1: i32) -> (i32, i32, i32) {
    %c0_i32 = arith.constant 0 : i32
    %c0_i32_0 = arith.constant 0 : i32
    return %arg0, %arg1, %c0_i32 : i32, i32, i32
  }
  func.func @transform_2(%arg0: i32, %arg1: i32) -> (i32, i32) {
    %c0_i32 = arith.constant 0 : i32
    %c0_i32_0 = arith.constant 0 : i32
    %c0_i32_1 = arith.constant 0 : i32
    return %c0_i32, %c0_i32_0 : i32, i32
  }
  func.func @transform_3(%arg0: i32, %arg1: i32) -> (i32, i32) {
    %c0_i32 = arith.constant 0 : i32
    %c0_i32_0 = arith.constant 0 : i32
    %c0_i32_1 = arith.constant 0 : i32
    return %c0_i32, %c0_i32_0 : i32, i32
  }
  func.func @transform_4(%arg0: i32, %arg1: i32) -> (i32, i32, i32) {
    %c0_i32 = arith.constant 0 : i32
    %c0_i32_0 = arith.constant 0 : i32
    %c0_i32_1 = arith.constant 0 : i32
    return %arg0, %c0_i32, %c0_i32_0 : i32, i32, i32
  }
}

</mosaic_0001>

<llo_original>
// kernel: triplet_embedding_forward.1
$region0: #{triplet_embedding_forward.1}
  #allocation0 [shape = 'u32[]', space=smem, size = 0x4, offset = 0x4, fixed_abs, tag = 'smem constant byte address 0x4 - core index']
  #allocation1 [shape = 'u32[144,128]{1,0:T(1,128)}', space=vmem, size = 0x12000, scoped, tag = 'internal scratch']
  #allocation2 [shape = 'f32[1,128]{1,0:T(1,128)}', space=vmem, size = 0x200, scoped, tag = 'scratch operand']
  #allocation3 [shape = 'f32[1,1]{1,0:T(1,128)}', space=vmem, size = 0x200, scoped, tag = 'scratch operand']
  %s0 = inlined_call_operand.vmem [shape: bf16[2,8,128], index: 0, kind: input, shape index: {}]
  %s1 = inlined_call_operand.vmem [shape: f32[2,8,1], index: 1, kind: input, shape index: {}]
  %s2 = inlined_call_operand.vmem [shape: bf16[128,128], index: 2, kind: input, shape index: {}]
  %s3 = inlined_call_operand.vmem [shape: f32[1,128], index: 3, kind: input, shape index: {}]
  %s4 = inlined_call_operand.hbm [shape: f32[2,1,128], index: 4, kind: output, shape index: {}]
  %s5 = sld [smem:[#allocation0]]
  $region57: #{triplet_embedding_forward.1} parent=0
    _
  %s7 = ssub.s32 1, %s5
  %s8 = scalar_select 0, %s7, %s5
  $region1: #{triplet_embedding_forward.1} parent=0
    #allocation4 [shape = 'u8[1024]{0}', space=vmem, size = 0x400, scoped, tag = 'output window, operand 0']
    #allocation5 [shape = 's32[2]{0}', space=sflag, size = 0x8, scoped, tag = 'scoped memory for triplet_embedding_forward.1']
    %9 = vsyncpa [#allocation5], 0
    %s10 = scalar_lea.sflag [#allocation5], 1
    %11 = vsyncpa %s10, 0
    loop: start=0, step=1, limit=4
    $region2: #{triplet_embedding_forward.1} parent=1 // loop_pre_header
      _
    $region3: #{triplet_embedding_forward.1} parent=1 // loop_header
      %s13 = sphi 0, %s17
      %p14 = scmp.ge.s32.totalorder %s13, 4
      %s20 = sphi 0, %s32
      %s21 = sphi 0, %s28
      %s22 = sphi 0, %s20
      %s23 = sphi 0, %s21
      %s24 = sphi 0, %s22
      %s25 = sphi 0, %s23
      %s37 = sphi 0, %s39
      %s40 = sphi 0, %s37
      %s41 = sphi 0, %s40
      %s57 = sphi 0, %s41
      %s65 = sphi 0, %s67
      %s68 = sphi 0, %s65
      %s69 = sphi 0, %s68
      %s85 = sphi 0, %s69
      %s89 = sphi 0, %s89
      %s91 = sphi 0, %s89
      %s92 = sphi 0, %s91
      %s106 = sphi 0, %s92
      %s110 = sphi 0, %s110
      %s112 = sphi 0, %s110
      %s113 = sphi 0, %s112
      %s127 = sphi 0, %s113
      %s133 = sphi 0, %s135
      %s136 = sphi 0, %s133
      %s137 = sphi 0, %s136
      %s153 = sphi 0, %s137
    $region4: #{triplet_embedding_forward.1} parent=1 // loop_header_branch
      %16 = sbr.rel (%p14) target = $region8
    $region5: #{triplet_embedding_forward.1} parent=1 // loop_body
      %s18 = ssub.s32 %s13, 1
      %s19 = ssub.s32 %s13, 2
      %s26 = sadd.s32 1, %s21
      %p27 = scmp.ge.s32.totalorder %s26, 1
      %s28 = scalar_select %p27, 0, %s26
      %s29 = sadd.s32 1, %s20
      %s30 = scalar_select %p27, %s29, %s20
      %p31 = scmp.ge.s32.totalorder %s30, 2
      %s32 = scalar_select %p31, 0, %s30
      %s33 = ssub.s32 %s20, %s32
      %s34 = ssub.s32 %s21, %s28
      %s35 = sor.u32 %s33, %s34
      %p36 = scmp.eq.s32.totalorder %s35, 0
      %s38 = sadd.s32 %s37, 1
      %s39 = scalar_select %p36, %s37, %s38
      %p42 = pneg %p36
      %p43 = scmp.eq.s32.totalorder %s13, 1
      %p44 = por %p42, %p43
      %p45 = scmp.ne.s32.totalorder %s37, %s40
      %p46 = scmp.eq.s32.totalorder %s13, 0
      %p47 = por %p45, %p46
      %p48 = scmp.ne.s32.totalorder %s37, %s40
      %p49 = scmp.eq.s32.totalorder %s18, 1
      %p50 = por %p48, %p49
      %p51 = scmp.ne.s32.totalorder %s40, %s41
      %p52 = scmp.eq.s32.totalorder %s18, 0
      %p53 = por %p51, %p52
      %p54 = scmp.ne.s32.totalorder %s40, %s41
      %p55 = scmp.eq.s32.totalorder %s19, 1
      %p56 = por %p54, %p55
      %p58 = scmp.ne.s32.totalorder %s41, %s57
      %p59 = scmp.eq.s32.totalorder %s19, 0
      %p60 = por %p58, %p59
      %s61 = ssub.s32 %s20, %s32
      %s62 = ssub.s32 %s21, %s28
      %s63 = sor.u32 %s61, %s62
      %p64 = scmp.eq.s32.totalorder %s63, 0
      %s66 = sadd.s32 %s65, 1
      %s67 = scalar_select %p64, %s65, %s66
      %p70 = pneg %p64
      %p71 = scmp.eq.s32.totalorder %s13, 1
      %p72 = por %p70, %p71
      %p73 = scmp.ne.s32.totalorder %s65, %s68
      %p74 = scmp.eq.s32.totalorder %s13, 0
      %p75 = por %p73, %p74
      %p76 = scmp.ne.s32.totalorder %s65, %s68
      %p77 = scmp.eq.s32.totalorder %s18, 1
      %p78 = por %p76, %p77
      %p79 = scmp.ne.s32.totalorder %s68, %s69
      %p80 = scmp.eq.s32.totalorder %s18, 0
      %p81 = por %p79, %p80
      %p82 = scmp.ne.s32.totalorder %s68, %s69
      %p83 = scmp.eq.s32.totalorder %s19, 1
      %p84 = por %p82, %p83
      %p86 = scmp.ne.s32.totalorder %s69, %s85
      %p87 = scmp.eq.s32.totalorder %s19, 0
      %p88 = por %p86, %p87
      %s90 = sadd.s32 %s89, 1
      %p93 = scmp.eq.s32.totalorder %s13, 1
      %p94 = scmp.ne.s32.totalorder %s89, %s91
      %p95 = scmp.eq.s32.totalorder %s13, 0
      %p96 = por %p94, %p95
      %p97 = scmp.ne.s32.totalorder %s89, %s91
      %p98 = scmp.eq.s32.totalorder %s18, 1
      %p99 = por %p97, %p98
      %p100 = scmp.ne.s32.totalorder %s91, %s92
      %p101 = scmp.eq.s32.totalorder %s18, 0
      %p102 = por %p100, %p101
      %p103 = scmp.ne.s32.totalorder %s91, %s92
      %p104 = scmp.eq.s32.totalorder %s19, 1
      %p105 = por %p103, %p104
      %p107 = scmp.ne.s32.totalorder %s92, %s106
      %p108 = scmp.eq.s32.totalorder %s19, 0
      %p109 = por %p107, %p108
      %s111 = sadd.s32 %s110, 1
      %p114 = scmp.eq.s32.totalorder %s13, 1
      %p115 = scmp.ne.s32.totalorder %s110, %s112
      %p116 = scmp.eq.s32.totalorder %s13, 0
      %p117 = por %p115, %p116
      %p118 = scmp.ne.s32.totalorder %s110, %s112
      %p119 = scmp.eq.s32.totalorder %s18, 1
      %p120 = por %p118, %p119
      %p121 = scmp.ne.s32.totalorder %s112, %s113
      %p122 = scmp.eq.s32.totalorder %s18, 0
      %p123 = por %p121, %p122
      %p124 = scmp.ne.s32.totalorder %s112, %s113
      %p125 = scmp.eq.s32.totalorder %s19, 1
      %p126 = por %p124, %p125
      %p128 = scmp.ne.s32.totalorder %s113, %s127
      %p129 = scmp.eq.s32.totalorder %s19, 0
      %p130 = por %p128, %p129
      %s131 = ssub.s32 %s20, %s32
      %p132 = scmp.eq.s32.totalorder %s131, 0
      %s134 = sadd.s32 %s133, 1
      %s135 = scalar_select %p132, %s133, %s134
      %p138 = pneg %p132
      %p139 = scmp.eq.s32.totalorder %s13, 1
      %p140 = por %p138, %p139
      %p141 = scmp.ne.s32.totalorder %s133, %s136
      %p142 = scmp.eq.s32.totalorder %s13, 0
      %p143 = por %p141, %p142
      %p144 = scmp.ne.s32.totalorder %s133, %s136
      %p145 = scmp.eq.s32.totalorder %s18, 1
      %p146 = por %p144, %p145
      %p147 = scmp.ne.s32.totalorder %s136, %s137
      %p148 = scmp.eq.s32.totalorder %s18, 0
      %p149 = por %p147, %p148
      %p150 = scmp.ne.s32.totalorder %s136, %s137
      %p151 = scmp.eq.s32.totalorder %s19, 1
      %p152 = por %p150, %p151
      %p154 = scmp.ne.s32.totalorder %s137, %s153
      %p155 = scmp.eq.s32.totalorder %s19, 0
      %p156 = por %p154, %p155
      %p157 = scmp.le.s32.totalorder 1, %s13
      %p158 = scmp.lt.s32.totalorder %s13, 3
      %p159 = pnand %p157, %p158
      %p160 = pneg %p159
      // Predicated region
      $region9: #{triplet_embedding_forward.1} parent=5 // pred_check
        _
      $region10: #{triplet_embedding_forward.1} parent=5 // pred_check_branch
        %162 = sbr.rel (%p159) target = $region12
      $region11: #{triplet_embedding_forward.1} parent=5 // pred_region
        %s163 = ssub.s32 %s13, 1
        // Predicated region
        $region13: #{triplet_embedding_forward.1} parent=11 // pred_check
          %p164 = pneg %p102
        $region14: #{triplet_embedding_forward.1} parent=11 // pred_check_branch
          %166 = sbr.rel (%p164) target = $region16
        $region15: #{triplet_embedding_forward.1} parent=11 // pred_region
          _
        $region16: #{triplet_embedding_forward.1} parent=11 // pred_fallthru
          _
        // Predicated region
        $region17: #{triplet_embedding_forward.1} parent=11 // pred_check
          %p167 = pneg %p123
        $region18: #{triplet_embedding_forward.1} parent=11 // pred_check_branch
          %169 = sbr.rel (%p167) target = $region20
        $region19: #{triplet_embedding_forward.1} parent=11 // pred_region
          _
        $region20: #{triplet_embedding_forward.1} parent=11 // pred_fallthru
          _
      $region12: #{triplet_embedding_forward.1} parent=5 // pred_fallthru
        _
      %p170 = scmp.lt.s32.totalorder %s13, 2
      // Predicated region
      $region21: #{triplet_embedding_forward.1} parent=5 // pred_check
        %p171 = pneg %p170
      $region22: #{triplet_embedding_forward.1} parent=5 // pred_check_branch
        %173 = sbr.rel (%p171) target = $region24
      $region23: #{triplet_embedding_forward.1} parent=5 // pred_region
        // Predicated region
        $region25: #{triplet_embedding_forward.1} parent=23 // pred_check
          %p174 = pneg %p47
        $region26: #{triplet_embedding_forward.1} parent=23 // pred_check_branch
          %176 = sbr.rel (%p174) target = $region28
        $region27: #{triplet_embedding_forward.1} parent=23 // pred_region
          %p177 = scmp.lt.s32.totalorder %s20, 1
          %s178 = scalar_select %p177, %s20, 1
          %p179 = scmp.lt.s32.totalorder %s21, 0
          %s180 = scalar_select %p179, %s21, 0
          %s181 = sadd.s32 %s180, %s178
          %s182 = smul.addr %s181, 4
          %s183 = scalar_lea.vmem %s0, %s182
        $region28: #{triplet_embedding_forward.1} parent=23 // pred_fallthru
          _
        // Predicated region
        $region29: #{triplet_embedding_forward.1} parent=23 // pred_check
          %p184 = pneg %p75
        $region30: #{triplet_embedding_forward.1} parent=23 // pred_check_branch
          %186 = sbr.rel (%p184) target = $region32
        $region31: #{triplet_embedding_forward.1} parent=23 // pred_region
          %p187 = scmp.lt.s32.totalorder %s20, 1
          %s188 = scalar_select %p187, %s20, 1
          %p189 = scmp.lt.s32.totalorder %s21, 0
          %s190 = scalar_select %p189, %s21, 0
          %s191 = sadd.s32 %s190, %s188
          %s192 = smul.addr %s191, 8
          %s193 = scalar_lea.vmem %s1, %s192
        $region32: #{triplet_embedding_forward.1} parent=23 // pred_fallthru
          _
      $region24: #{triplet_embedding_forward.1} parent=5 // pred_fallthru
        _
      %p194 = scmp.le.s32.totalorder 1, %s13
      %p195 = scmp.lt.s32.totalorder %s13, 3
      %p196 = pnand %p194, %p195
      %p197 = pneg %p196
      // Predicated region
      $region33: #{triplet_embedding_forward.1} parent=5 // pred_check
        _
      $region34: #{triplet_embedding_forward.1} parent=5 // pred_check_branch
        %199 = sbr.rel (%p196) target = $region36
      $region35: #{triplet_embedding_forward.1} parent=5 // pred_region
        %s200 = ssub.s32 %s13, 1
        %p201 = scmp.lt.s32.totalorder %s22, 1
        %s202 = scalar_select %p201, %s22, 1
        %p203 = scmp.lt.s32.totalorder %s23, 0
        %s204 = scalar_select %p203, %s23, 0
        %s205 = sadd.s32 %s204, %s202
        %s206 = smul.addr %s205, 4
        %s207 = scalar_lea.vmem %s0, %s206
        %p208 = pneg %p53
        %p209 = pneg %p50
        %p210 = scmp.lt.s32.totalorder %s22, 1
        %s211 = scalar_select %p210, %s22, 1
        %p212 = scmp.lt.s32.totalorder %s23, 0
        %s213 = scalar_select %p212, %s23, 0
        %s214 = sadd.s32 %s213, %s211
        %s215 = smul.addr %s214, 8
        %s216 = scalar_lea.vmem %s1, %s215
        %p217 = pneg %p81
        %p218 = pneg %p78
        %p219 = pneg %p102
        %p220 = pneg %p99
        %p221 = pneg %p123
        %p222 = pneg %p120
        %p223 = pneg %p149
        %p224 = pneg %p146
        %s225 = sand.u32 %s136, 1
        %s226 = scalar_lea.sflag [#allocation5], %s225
        %s227 = sand.u32 %s136, 1
        %s228 = scalar_lea.vmem [#allocation4], %s227
        %p229 = scmp.lt.s32.totalorder %s22, 1
        %s230 = scalar_select %p229, %s22, 1
        %p231 = scmp.lt.s32.totalorder %s23, 0
        %s232 = scalar_select %p231, %s23, 0
        %s233 = sadd.s32 %s232, %s230
        %s234 = smul.addr %s233, 4
        %s235 = scalar_lea.vmem %s0, %s234
        %p236 = scmp.lt.s32.totalorder %s22, 1
        %s237 = scalar_select %p236, %s22, 1
        %p238 = scmp.lt.s32.totalorder %s23, 0
        %s239 = scalar_select %p238, %s23, 0
        %s240 = sadd.s32 %s239, %s237
        %s241 = smul.addr %s240, 8
        %s242 = scalar_lea.vmem %s1, %s241
        %p244 = scmp.eq.s32.totalorder %s23, 0
        // Predicated region
        $region37: #{triplet_embedding_forward.1} parent=35 // pred_check
          %p245 = pneg %p244
        $region38: #{triplet_embedding_forward.1} parent=35 // pred_check_branch
          %247 = sbr.rel (%p245) target = $region40
        $region39: #{triplet_embedding_forward.1} parent=35 // pred_region
          %248 = vst [vmem:[#allocation2] sm:$0x1] 0.0
          %vm249 = vcmask 0
          %250 = vst.msk [vmem:[#allocation3] sm:$0x1] %vm249, 0.0
        $region40: #{triplet_embedding_forward.1} parent=35 // pred_fallthru
          _
        %v251 = vld [vmem:[%s235] sm:$0xf]
        %v252 = vld [vmem:[%s2] sm:$0xf]
        %v253 = vld [vmem:[%s2 + $0x4] sm:$0xf]
        %v254 = vld [vmem:[%s2 + $0x8] sm:$0xf]
        %v255 = vld [vmem:[%s2 + $0xc] sm:$0xf]
        %v256 = vld [vmem:[%s2 + $0x10] sm:$0xf]
        %v257 = vld [vmem:[%s2 + $0x14] sm:$0xf]
        %v258 = vld [vmem:[%s2 + $0x18] sm:$0xf]
        %v259 = vld [vmem:[%s2 + $0x1c] sm:$0xf]
        %v260 = vld [vmem:[%s2 + $0x20] sm:$0xf]
        %v261 = vld [vmem:[%s2 + $0x24] sm:$0xf]
        %v262 = vld [vmem:[%s2 + $0x28] sm:$0xf]
        %v263 = vld [vmem:[%s2 + $0x2c] sm:$0xf]
        %v264 = vld [vmem:[%s2 + $0x30] sm:$0xf]
        %v265 = vld [vmem:[%s2 + $0x34] sm:$0xf]
        %v266 = vld [vmem:[%s2 + $0x38] sm:$0xf]
        %v267 = vld [vmem:[%s2 + $0x3c] sm:$0xf]
        %v268 = vld [vmem:[%s3] sm:$0x1]
        %v270 = vlaneseq
        %v271 = vshrl.u32 %v270, 7
        %v272 = vsub.s32 0, %v271
        %v273 = vrot.slane %v268, %v272
        %v291 = vunpack.c.l.b16 %v252
        %v292 = vunpack.c.l.b16 %v253
        %v293 = vunpack.c.l.b16 %v254
        %v294 = vunpack.c.l.b16 %v255
        %v295 = vunpack.c.l.b16 %v256
        %v296 = vunpack.c.l.b16 %v257
        %v297 = vunpack.c.l.b16 %v258
        %v298 = vunpack.c.l.b16 %v259
        %v299 = vunpack.c.l.b16 %v260
        %v300 = vunpack.c.l.b16 %v261
        %v301 = vunpack.c.l.b16 %v262
        %v302 = vunpack.c.l.b16 %v263
        %v303 = vunpack.c.l.b16 %v264
        %v304 = vunpack.c.l.b16 %v265
        %v305 = vunpack.c.l.b16 %v266
        %v306 = vunpack.c.l.b16 %v267
        %v307 = vpack.c.b16 %v292, %v291
        %v308 = vpack.c.b16 %v294, %v293
        %v309 = vpack.c.b16 %v296, %v295
        %v310 = vpack.c.b16 %v298, %v297
        %v311 = vpack.c.b16 %v300, %v299
        %v312 = vpack.c.b16 %v302, %v301
        %v313 = vpack.c.b16 %v304, %v303
        %v314 = vpack.c.b16 %v306, %v305
        %323 = vmatprep.subr.bf16.mxu0 0
        %324 = vmatpush1.bf16.msra.mxu0 %v307
        %325 = vmatprep.subr.bf16.mxu0 0
        %326 = vmatpush1.bf16.msra.mxu0 %v308
        %327 = vmatprep.subr.bf16.mxu0 0
        %328 = vmatpush1.bf16.msra.mxu0 %v309
        %329 = vmatprep.subr.bf16.mxu0 0
        %330 = vmatpush1.bf16.msra.mxu0 %v310
        %331 = vmatprep.subr.bf16.mxu0 0
        %332 = vmatpush1.bf16.msra.mxu0 %v311
        %333 = vmatprep.subr.bf16.mxu0 0
        %334 = vmatpush1.bf16.msra.mxu0 %v312
        %335 = vmatprep.subr.bf16.mxu0 0
        %336 = vmatpush1.bf16.msra.mxu0 %v313
        %337 = vmatprep.subr.bf16.mxu0 0
        %338 = vmatpush1.bf16.msra.mxu0 %v314
        %339 = vmatprep.subr.bf16.mxu0 0
        %340 = vmatpush1.bf16.msra.mxu0 0
        %341 = vmatprep.subr.bf16.mxu0 0
        %342 = vmatpush1.bf16.msra.mxu0 0
        %343 = vmatprep.subr.bf16.mxu0 0
        %344 = vmatpush1.bf16.msra.mxu0 0
        %345 = vmatprep.subr.bf16.mxu0 0
        %346 = vmatpush1.bf16.msra.mxu0 0
        %347 = vmatprep.subr.bf16.mxu0 0
        %348 = vmatpush1.bf16.msra.mxu0 0
        %349 = vmatprep.subr.bf16.mxu0 0
        %350 = vmatpush1.bf16.msra.mxu0 0
        %351 = vmatprep.subr.bf16.mxu0 0
        %352 = vmatpush1.bf16.msra.mxu0 0
        %353 = vmatprep.subr.bf16.mxu0 0
        %354 = vmatpush1.bf16.msra.mxu0 0
        %355 = vmatprep.mubr.bf16.mxu0 0
        %356 = vmatmul.mubr.bf16.gmra.mrb[0].mxu0 %v251
        %v357 = vpop.f32.mrb[0].mxu0
        %v358 = vadd.f32 %v273, %v357
        %v359 = vpop.f32.mrb[0].mxu0
        %v360 = vpop.f32.mrb[0].mxu0
        %v361 = vpop.f32.mrb[0].mxu0
        %362 = vdwg.mxu0
        %v363 = vmul.f32 %v358, 0.70710677
        %v364 = vand.u32 2147483647, %v363
        %v365 = vmul.f32 %v364, 0.3275911
        %v366 = vadd.f32 %v365, 1.0
        %v367 = vrcp.pop %v366
        %v368 = vmul.f32 %v367, 1.0614054
        %v369 = vadd.f32 %v368, -1.4531521
        %v370 = vmul.f32 %v367, %v369
        %v371 = vadd.f32 %v370, 1.4214138
        %v372 = vmul.f32 %v367, %v371
        %v373 = vadd.f32 %v372, -0.28449672
        %v374 = vmul.f32 %v367, %v373
        %v375 = vadd.f32 %v374, 0.2548296
        %v376 = vmul.f32 %v367, %v375
        %v377 = vmul.f32 %v364, %v364
        %v378 = vsub.f32 0.0, %v377
        %v379 = vmul.f32 %v378, 1.442695
        %v380 = vpow.pop %v379
        %v381 = vmul.f32 %v376, %v380
        %v382 = vsub.f32 1.0, %v381
        %vm383 = vcmp.ge.f32.partialorder %v363, 0.0
        %v384 = vsub.f32 0.0, %v382
        %v385 = vsel %vm383, %v382, %v384
        %v386 = vmul.f32 %v358, 0.5
        %v387 = vadd.f32 %v385, 1.0
        %v388 = vmul.f32 %v386, %v387
        %v389 = vld [vmem:[%s242] sm:$0xff]
        %v390 = vld [vmem:[#allocation2] sm:$0x1]
        %392 = vset.pattern.permute.xlu0 0
        %393 = vperm.xlu0 %392, %v389
        %v394 = vpop.permute.xlu0 %393
        %v396 = vmul.f32 %v388, %v394
        %v397 = vrot.slane %v396, 4
        %v398 = vadd.f32 %v396, %v397
        %v399 = vrot.slane %v398, 2
        %v400 = vadd.f32 %v398, %v399
        %v401 = vrot.slane %v400, 1
        %v402 = vadd.f32 %v400, %v401
        %v403 = vadd.f32 %v390, %v402
        %404 = vst [vmem:[#allocation2] sm:$0x1] %v403
        %v405 = vld [vmem:[#allocation3] sm:$0x1]
        %vm406 = vcmask 7168
        %v407 = vsel %vm406, %v389, 0.0
        %v408 = vrot.slane %v407, 4
        %v409 = vadd.f32 %v407, %v408
        %v410 = vrot.slane %v409, 2
        %v411 = vadd.f32 %v409, %v410
        %v412 = vrot.slane %v411, 1
        %v413 = vadd.f32 %v411, %v412
        %v414 = vadd.f32 %v405, %v413
        %vm415 = vcmask 0
        %416 = vst.msk [vmem:[#allocation3] sm:$0x1] %vm415, %v414
        // Predicated region
        $region41: #{triplet_embedding_forward.1} parent=35 // pred_check
          %p417 = pneg %p244
        $region42: #{triplet_embedding_forward.1} parent=35 // pred_check_branch
          %419 = sbr.rel (%p417) target = $region44
        $region43: #{triplet_embedding_forward.1} parent=35 // pred_region
          %v420 = vld [vmem:[#allocation3] sm:$0x1]
          %v421 = vmax.f32 %v420, 1.0
          %v422 = vld [vmem:[#allocation2] sm:$0x1]
          %v423 = vrcp.pop %v421
          %425 = vset.pattern.permute.xlu0 0
          %426 = vperm.xlu0 %425, %v423
          %v427 = vpop.permute.xlu0 %426
          %v429 = vlaneseq
          %v430 = vshrl.u32 %v429, 7
          %v431 = vsub.s32 0, %v430
          %v432 = vrot.slane %v427, %v431
          %v433 = vmul.f32 %v422, %v432
          %v434 = vmul.f32 %v433, %v433
          %vm435 = vcmask 1040384
          %v436 = vsel %vm435, %v434, 0.0
          %437 = vadd.xlane.f32.xlu0 %v436
          %v438 = vpop.xlane.xlu0 %437
          %v439 = vmax.f32 %v438, 1e-24
          %v440 = vrsqrt.pop %v439
          %v441 = vmul.f32 %v433, %v440
          %442 = vst [vmem:[%s228] sm:$0x1] %v441
        $region44: #{triplet_embedding_forward.1} parent=35 // pred_fallthru
          _
        %s443 = sand.u32 %s136, 1
        %s444 = scalar_lea.sflag [#allocation5], %s443
        %s445 = sand.u32 %s136, 1
        %s446 = scalar_lea.vmem [#allocation4], %s445
        // Predicated region
        $region45: #{triplet_embedding_forward.1} parent=35 // pred_check
          %p447 = pneg %p146
        $region46: #{triplet_embedding_forward.1} parent=35 // pred_check_branch
          %449 = sbr.rel (%p447) target = $region48
        $region47: #{triplet_embedding_forward.1} parent=35 // pred_region
          %s451 = ssub.s32 16, 16
          %452 = vsyncadd %s444, %s451
          %s453 = smul.addr %s22, 16
          %s454 = scalar_lea.hbm %s4, %s453
          %s456 = sshll.u32 %s446, 4
          %s457 = int_to_ptr.vmem [resolvable:$true] %s456
          %459 = dma.vmem_to_hbm [thread:$0]  %s457, 16, %s454, %s444
        $region48: #{triplet_embedding_forward.1} parent=35 // pred_fallthru
          _
      $region36: #{triplet_embedding_forward.1} parent=5 // pred_fallthru
        _
      %p460 = scmp.le.s32.totalorder 2, %s13
      // Predicated region
      $region49: #{triplet_embedding_forward.1} parent=5 // pred_check
        %p461 = pneg %p460
      $region50: #{triplet_embedding_forward.1} parent=5 // pred_check_branch
        %463 = sbr.rel (%p461) target = $region52
      $region51: #{triplet_embedding_forward.1} parent=5 // pred_region
        %s464 = ssub.s32 %s13, 2
        // Predicated region
        $region53: #{triplet_embedding_forward.1} parent=51 // pred_check
          %p465 = pneg %p152
        $region54: #{triplet_embedding_forward.1} parent=51 // pred_check_branch
          %467 = sbr.rel (%p465) target = $region56
        $region55: #{triplet_embedding_forward.1} parent=51 // pred_region
          %s468 = sand.u32 %s137, 1
          %s469 = scalar_lea.sflag [#allocation5], %s468
          %s470 = sand.u32 %s137, 1
          %s471 = scalar_lea.vmem [#allocation4], %s470
          %472 = dma.done %s469, 16
        $region56: #{triplet_embedding_forward.1} parent=51 // pred_fallthru
          _
      $region52: #{triplet_embedding_forward.1} parent=5 // pred_fallthru
        _
    $region6: #{triplet_embedding_forward.1} parent=1 // loop_footer
      %s17 = sadd.s32 1, %s13
    $region7: #{triplet_embedding_forward.1} parent=1 // loop_footer_branch
      %12 = sbr.rel target = $region3
    $region8: #{triplet_embedding_forward.1} parent=1 // loop_exit
      _
    %473 = vsyncpa [#allocation5], 1
    %s474 = scalar_lea.sflag [#allocation5], 1
    %475 = vsyncpa %s474, 1

</llo_original>
